<compile_context>
chip_gen: v6e
topology: v6e:2x2x1
jax: 0.10.0
libtpu: 0.0.40
codegen_flags: <defaults>
</compile_context>

<pallas_src>
import functools

import jax
import jax.numpy as jnp
from jax.experimental import pallas as pl
from jax.experimental.pallas import tpu as pltpu

KS = 7
PAD = KS // 2
BN_EPS = 1e-5


# ---------------- in-kernel helpers ----------------

def _hswish(v):
    # h_swish(x) = x * relu6(x + 3) / 6
    return v * jnp.clip(v + 3.0, 0.0, 6.0) * (1.0 / 6.0)


def _dwconv1d_lc(v, w):
    """Depthwise 1-D conv, 'same' zero padding.

    Channels-on-lanes layout: v: (L, C) float32, w: (K, C) float32.
    Zero-padded buffer + static slices (no rolls / iota masks).
    """
    L, C = v.shape
    K = w.shape[0]
    p = K // 2
    zpad = jnp.zeros((p, C), v.dtype)
    vp = jnp.concatenate([zpad, v, zpad], axis=0)      # (L + 2p, C)
    out = jnp.zeros_like(v)
    for k in range(K):                                  # K = 7, static unroll
        out = out + vp[k:k + L, :] * w[k:k + 1, :]
    return out


def _gate_chain(x_h, x_w, w, scale, bias, *, valid_h=None):
    """Pooled means x_h (Hp, C), x_w (W, C) -> gates a_h (Hp, C), a_w (W, C).

    If valid_h < Hp (H was padded to a tile multiple), rows >= valid_h are
    zeroed between the two convs so boundary outputs match PyTorch's 'same'
    zero padding at the true H edge.
    """
    t_h = _hswish(_dwconv1d_lc(x_h, w) * scale + bias)
    if valid_h is not None and valid_h < x_h.shape[0]:
        rows = jax.lax.broadcasted_iota(jnp.int32, t_h.shape, 0)
        t_h = jnp.where(rows < valid_h, t_h, 0.0)
    t_w = _hswish(_dwconv1d_lc(x_w, w) * scale + bias)
    a_h = jax.nn.sigmoid(_dwconv1d_lc(t_h, w))
    a_w = jax.nn.sigmoid(_dwconv1d_lc(t_w, w))
    return a_h, a_w


# ---------------- fused single-pass kernel (grid over B) ----------------

def _fused_kernel(x_ref, w_ref, scale_ref, bias_ref, y_ref):
    x = x_ref[0]                                        # (C, H, W), native dtype
    xf = x.astype(jnp.float32)
    x_h = jnp.mean(xf, axis=2).T                        # (H, C) mean over W
    x_w = jnp.mean(xf, axis=1).T                        # (W, C) mean over H
    a_h, a_w = _gate_chain(x_h, x_w, w_ref[...], scale_ref[...], bias_ref[...])
    ah = a_h.T.astype(x.dtype)                          # (C, H)
    aw = a_w.T.astype(x.dtype)                          # (C, W)
    # no materialized (C, H, W) gate temp
    y_ref[0] = ((x * aw[:, None, :]) * ah[:, :, None]).astype(y_ref.dtype)


# ---------------- Phase 1: pooling + gate ----------------

def _gate_kernel(x_ref, w_ref, scale_ref, bias_ref, ah_ref, aw_ref,
                 xh_s, xw_s, *, true_h):
    h = pl.program_id(1)
    nh = pl.num_programs(1)
    th = x_ref.shape[2]
    Hp = xh_s.shape[0]

    x = x_ref[0].astype(jnp.float32)                    # (C, th, W)

    # mean over W for the H rows of this tile -> (th, C), stash in scratch
    row0 = pl.multiple_of(h * th, 8)                    # th % 8 == 0 or th == Hp
    xh_s[pl.ds(row0, th), :] = jnp.mean(x, axis=2).T

    @pl.when(h == 0)
    def _init():
        xw_s[...] = jnp.zeros_like(xw_s)

    # partial sum over the H rows of this tile, kept in (C, W) layout
    # (no per-tile transpose rides the streaming loop)
    xw_s[...] += jnp.sum(x, axis=1)

    @pl.when(h == nh - 1)
    def _finalize():
        x_h = xh_s[...]                                 # (Hp, C) mean over W
        x_w = xw_s[...].T * (1.0 / true_h)              # (W, C) mean over H
        a_h, a_w = _gate_chain(x_h, x_w, w_ref[...], scale_ref[...],
                               bias_ref[...], valid_h=true_h)
        ah_ref[0] = a_h                                 # (Hp, C)
        aw_ref[0] = a_w.T                               # (C, W), pre-transposed


# ---------------- Phase 2: elementwise apply ----------------

def _apply_kernel(x_ref, ah_ref, aw_ref, y_ref):
    x = x_ref[0]                                        # (C, th, W), native dtype
    ah = ah_ref[0].T.astype(x.dtype)                    # (C, th) (small transpose)
    aw = aw_ref[0].astype(x.dtype)                      # (C, W), already (C, W)
    # no materialized (C, th, W) gate temp; multiplies stay in x's dtype
    y_ref[0] = ((x * aw[:, None, :]) * ah[:, :, None]).astype(y_ref.dtype)


# ---------------- sizing helpers ----------------

def _vmem_limit_cap():
    """Device-aware cap on vmem_limit_bytes (~40 MiB on v7x, ~80 MiB v5e/v6e)."""
    cap = 64 << 20
    try:
        info = pltpu.get_tpu_info()
        cap = int(getattr(info, "vmem_capacity_bytes", cap))
    except Exception:
        pass
    return min((cap * 5) // 8, 80 << 20)


def _pick_tile_h(H, row_bytes, tile_budget):
    """Pick (tile_h, padded_H). tile_h divides padded_H; tile_h % 8 == 0 or
    tile_h == padded_H == H. Never falls back to an over-budget full-H tile:
    awkward H values are padded instead."""
    rows = max(8, (tile_budget // max(1, row_bytes)) // 8 * 8)
    if H <= rows:
        return H, H
    th = rows
    while th >= 8:
        if H % th == 0:
            return th, H
        th -= 8
    th = rows
    return th, pl.cdiv(H, th) * th


# ---------------- wrapper ----------------

def ca_atten(x, w_conv, bn_scale, bn_bias, *, tile_h=None,
             force_two_phase=False):
    """x: (B, C, H, W); w_conv: (C, K); bn_scale/bn_bias: (C,) (folded BN)."""
    B, C, H, W = x.shape
    K = w_conv.shape[-1]
    itemsize = jnp.dtype(x.dtype).itemsize

    w_kc = jnp.asarray(w_conv, jnp.float32).T.reshape(K, C)    # lane-major
    scale = jnp.asarray(bn_scale, jnp.float32).reshape(1, C)
    bias = jnp.asarray(bn_bias, jnp.float32).reshape(1, C)

    limit_cap = _vmem_limit_cap()

    # ---- fused single-pass path: one read + one write of x ----
    slab_bytes = C * H * W * itemsize
    f32_temp = 0 if x.dtype == jnp.float32 else C * H * W * 4
    gate_bytes = 4 * (H + W) * C * 4
    fused_need = 5 * slab_bytes + f32_temp + gate_bytes + (2 << 20)

    if (not force_two_phase) and tile_h is None and fused_need <= limit_cap:
        return pl.pallas_call(
            _fused_kernel,
            out_shape=jax.ShapeDtypeStruct((B, C, H, W), x.dtype),
            grid_spec=pltpu.PrefetchScalarGridSpec(
                num_scalar_prefetch=0,
                grid=(B,),
                in_specs=[
                    pl.BlockSpec((1, C, H, W), lambda b: (b, 0, 0, 0)),
                    pl.BlockSpec((K, C), lambda b: (0, 0)),
                    pl.BlockSpec((1, C), lambda b: (0, 0)),
                    pl.BlockSpec((1, C), lambda b: (0, 0)),
                ],
                out_specs=pl.BlockSpec((1, C, H, W), lambda b: (b, 0, 0, 0)),
            ),
            compiler_params=pltpu.CompilerParams(
                dimension_semantics=("parallel",),
                vmem_limit_bytes=max(16 << 20, min(fused_need, limit_cap))),
        )(x, w_kc, scale, bias)

    # ---- two-phase streaming fallback ----
    row_bytes = C * W * itemsize
    scratch_est = (H + W) * C * 4
    tile_budget = max(1 << 20, (limit_cap - scratch_est - (4 << 20)) // 5)

    if tile_h is not None:
        th = tile_h
        if th != H and th % 8 != 0:
            raise ValueError(f"tile_h={th} must be a multiple of 8 (or == H)")
        Hp = H if H % th == 0 else pl.cdiv(H, th) * th
    else:
        th, Hp = _pick_tile_h(H, row_bytes, tile_budget)

    x_p = x if Hp == H else jnp.pad(x, ((0, 0), (0, 0), (0, Hp - H), (0, 0)))
    n_h = Hp // th

    tile_bytes = C * th * W * itemsize
    p1_extra = (Hp + W) * C * 4 + 2 * (Hp * C + W * C) * 4
    vmem_need = 5 * tile_bytes + p1_extra + (2 << 20)
    vmem_limit = max(16 << 20, min(vmem_need, limit_cap))

    # Phase 1: pooling + gate (a_h (B, Hp, C), a_w (B, C, W))
    gate_fn = functools.partial(_gate_kernel, true_h=H)
    a_h, a_w = pl.pallas_call(
        gate_fn,
        out_shape=(jax.ShapeDtypeStruct((B, Hp, C), jnp.float32),
                   jax.ShapeDtypeStruct((B, C, W), jnp.float32)),
        grid_spec=pltpu.PrefetchScalarGridSpec(
            num_scalar_prefetch=0,
            grid=(B, n_h),
            in_specs=[
                pl.BlockSpec((1, C, th, W), lambda b, h: (b, 0, h, 0)),
                pl.BlockSpec((K, C), lambda b, h: (0, 0)),
                pl.BlockSpec((1, C), lambda b, h: (0, 0)),
                pl.BlockSpec((1, C), lambda b, h: (0, 0)),
            ],
            out_specs=[
                pl.BlockSpec((1, Hp, C), lambda b, h: (b, 0, 0)),
                pl.BlockSpec((1, C, W), lambda b, h: (b, 0, 0)),
            ],
            scratch_shapes=[pltpu.VMEM((Hp, C), jnp.float32),
                            pltpu.VMEM((C, W), jnp.float32)],
        ),
        compiler_params=pltpu.CompilerParams(
            dimension_semantics=("parallel", "arbitrary"),
            vmem_limit_bytes=vmem_limit),
    )(x_p, w_kc, scale, bias)

    # Phase 2: y = x * a_h * a_w (tiled, memory-bound)
    y_p = pl.pallas_call(
        _apply_kernel,
        out_shape=jax.ShapeDtypeStruct((B, C, Hp, W), x.dtype),
        grid_spec=pltpu.PrefetchScalarGridSpec(
            num_scalar_prefetch=0,
            grid=(B, n_h),
            in_specs=[
                pl.BlockSpec((1, C, th, W), lambda b, h: (b, 0, h, 0)),
                pl.BlockSpec((1, th, C), lambda b, h: (b, h, 0)),
                pl.BlockSpec((1, C, W), lambda b, h: (b, 0, 0)),
            ],
            out_specs=pl.BlockSpec((1, C, th, W), lambda b, h: (b, 0, h, 0)),
        ),
        compiler_params=pltpu.CompilerParams(
            dimension_semantics=("parallel", "parallel"),
            vmem_limit_bytes=vmem_limit),
    )(x_p, a_h, a_w)

    return y_p if Hp == H else y_p[:, :, :H, :]


# ---------------- pure-JAX reference ----------------

def _ref_dwconv1d(v, w):
    L = v.shape[-1]
    vp = jnp.pad(v, ((0, 0), (0, 0), (PAD, PAD)))
    out = jnp.zeros_like(v)
    for k in range(w.shape[-1]):
        out = out + vp[:, :, k:k + L] * w[:, k][None, :, None]
    return out


def ca_atten_reference(x, w_conv, bn_scale, bn_bias):
    scale = bn_scale.reshape(1, -1, 1)
    bias = bn_bias.reshape(1, -1, 1)
    x_h = jnp.mean(x, axis=3)
    x_w = jnp.mean(x, axis=2)
    t_h = _hswish(_ref_dwconv1d(x_h, w_conv) * scale + bias)
    t_w = _hswish(_ref_dwconv1d(x_w, w_conv) * scale + bias)
    a_h = jax.nn.sigmoid(_ref_dwconv1d(t_h, w_conv))
    a_w = jax.nn.sigmoid(_ref_dwconv1d(t_w, w_conv))
    return x * a_w[:, :, None, :] * a_h[:, :, :, None]


# ---------------- main ----------------

if __name__ == "__main__":
    B, C, H, W = 2, 4, 16, 16

    key = jax.random.PRNGKey(0)
    kx, kw, kg, kb, km, kv = jax.random.split(key, 6)

    x = jax.random.normal(kx, (B, C, H, W), dtype=jnp.float32)

    # Parameter init (shapes from nn.Conv1d(C, C, 7, groups=C, bias=False)
    # and nn.BatchNorm1d(C)).
    w_conv = jax.random.uniform(kw, (C, KS), jnp.float32, -0.5, 0.5)
    gamma = 1.0 + 0.1 * jax.random.normal(kg, (C,), jnp.float32)
    beta = 0.1 * jax.random.normal(kb, (C,), jnp.float32)
    run_mean = 0.1 * jax.random.normal(km, (C,), jnp.float32)
    run_var = jax.random.uniform(kv, (C,), jnp.float32, 0.5, 1.5)

    # Fold BN (eval mode) into per-channel scale / bias.
    bn_scale = gamma / jnp.sqrt(run_var + BN_EPS)
    bn_bias = beta - run_mean * bn_scale

    y_ref = ca_atten_reference(x, w_conv, bn_scale, bn_bias)

    # 1) Fused single-pass path (default dispatch at this size).
    y = ca_atten(x, w_conv, bn_scale, bn_bias)
    jax.block_until_ready(y)
    assert y.shape == (B, C, H, W)
    assert jnp.allclose(y, y_ref, atol=1e-5, rtol=1e-5), (
        f"fused: max abs diff {jnp.max(jnp.abs(y - y_ref))}")

    # 2) Two-phase path, H split into two tiles -> exercises accumulation.
    y2 = ca_atten(x, w_conv, bn_scale, bn_bias, tile_h=8)
    jax.block_until_ready(y2)
    assert jnp.allclose(y2, y_ref, atol=1e-5, rtol=1e-5), (
        f"two-phase: max abs diff {jnp.max(jnp.abs(y2 - y_ref))}")

    # 3) Two-phase path with H padding (H=20, tile 8 -> padded to 24).
    x3 = jax.random.normal(kx, (B, C, 20, W), dtype=jnp.float32)
    y3_ref = ca_atten_reference(x3, w_conv, bn_scale, bn_bias)
    y3 = ca_atten(x3, w_conv, bn_scale, bn_bias, tile_h=8)
    jax.block_until_ready(y3)
    assert y3.shape == x3.shape
    assert jnp.allclose(y3, y3_ref, atol=1e-5, rtol=1e-5), (
        f"padded two-phase: max abs diff {jnp.max(jnp.abs(y3 - y3_ref))}")

    # 4) Forced two-phase with auto tile sizing.
    y4 = ca_atten(x, w_conv, bn_scale, bn_bias, force_two_phase=True)
    jax.block_until_ready(y4)
    assert jnp.allclose(y4, y_ref, atol=1e-5, rtol=1e-5), (
        f"auto two-phase: max abs diff {jnp.max(jnp.abs(y4 - y_ref))}")

    print("KERNEL_OK")
</pallas_src>

<mosaic_0001>
module attributes {stable_mosaic.version = 11 : i64} {
  func.func @_fused_kernel(%arg0: i32, %arg1: memref<1x4x16x16xf32, #tpu.memory_space<vmem>>, %arg2: memref<7x4xf32, #tpu.memory_space<vmem>>, %arg3: memref<1x4xf32, #tpu.memory_space<vmem>>, %arg4: memref<1x4xf32, #tpu.memory_space<vmem>>, %arg5: memref<1x4x16x16xf32, #tpu.memory_space<vmem>>) attributes {dimension_semantics = [#tpu.dimension_semantics<parallel>], iteration_bounds = array<i64: 2>, scalar_prefetch = 0 : i64, scratch_operands = 0 : i64, tpu.core_type = #tpu.core_type<tc>, window_params = [{transform_indices = @transform_0, window_bounds = array<i64: 1, 4, 16, 16>}, {pipeline_mode = #tpu.pipeline_mode<synchronous>, transform_indices = @transform_1, window_bounds = array<i64: 7, 4>}, {pipeline_mode = #tpu.pipeline_mode<synchronous>, transform_indices = @transform_2, window_bounds = array<i64: 1, 4>}, {pipeline_mode = #tpu.pipeline_mode<synchronous>, transform_indices = @transform_3, window_bounds = array<i64: 1, 4>}, {transform_indices = @transform_4, window_bounds = array<i64: 1, 4, 16, 16>}]} {
    %c0 = arith.constant 0 : index
    %c0_0 = arith.constant 0 : index
    %c0_1 = arith.constant 0 : index
    %c0_2 = arith.constant 0 : index
    %0 = vector.load %arg1[%c0, %c0_0, %c0_1, %c0_2] : memref<1x4x16x16xf32, #tpu.memory_space<vmem>>, vector<1x4x16x16xf32>
    %1 = vector.shape_cast %0 : vector<1x4x16x16xf32> to vector<4x16x16xf32>
    %cst = arith.constant dense<0.000000e+00> : vector<4x16xf32>
    %2 = vector.multi_reduction <add>, %1, %cst [2] : vector<4x16x16xf32> to vector<4x16xf32>
    %cst_3 = arith.constant 1.600000e+01 : f32
    %3 = vector.broadcast %cst_3 : f32 to vector<4x16xf32>
    %4 = arith.divf %2, %3 : vector<4x16xf32>
    %5 = tpu.transpose %4, [1, 0] : vector<4x16xf32> -> vector<16x4xf32>
    %cst_4 = arith.constant dense<0.000000e+00> : vector<4x16xf32>
    %6 = vector.multi_reduction <add>, %1, %cst_4 [1] : vector<4x16x16xf32> to vector<4x16xf32>
    %cst_5 = arith.constant 1.600000e+01 : f32
    %7 = vector.broadcast %cst_5 : f32 to vector<4x16xf32>
    %8 = arith.divf %6, %7 : vector<4x16xf32>
    %9 = tpu.transpose %8, [1, 0] : vector<4x16xf32> -> vector<16x4xf32>
    %c0_6 = arith.constant 0 : index
    %c0_7 = arith.constant 0 : index
    %10 = vector.load %arg2[%c0_6, %c0_7] : memref<7x4xf32, #tpu.memory_space<vmem>>, vector<7x4xf32>
    %c0_8 = arith.constant 0 : index
    %c0_9 = arith.constant 0 : index
    %11 = vector.load %arg3[%c0_8, %c0_9] : memref<1x4xf32, #tpu.memory_space<vmem>>, vector<1x4xf32>
    %c0_10 = arith.constant 0 : index
    %c0_11 = arith.constant 0 : index
    %12 = vector.load %arg4[%c0_10, %c0_11] : memref<1x4xf32, #tpu.memory_space<vmem>>, vector<1x4xf32>
    %cst_12 = arith.constant 0.000000e+00 : f32
    %13 = vector.broadcast %cst_12 : f32 to vector<3x4xf32>
    %14 = tpu.concatenate %13, %5, %13 in 0 : vector<3x4xf32>, vector<16x4xf32>, vector<3x4xf32> -> vector<22x4xf32>
    %cst_13 = arith.constant 0.000000e+00 : f32
    %15 = vector.broadcast %cst_13 : f32 to vector<16x4xf32>
    %16 = vector.extract_strided_slice %14 {offsets = [0, 0], sizes = [16, 4], strides = [1, 1]} : vector<22x4xf32> to vector<16x4xf32>
    %17 = vector.extract_strided_slice %10 {offsets = [0, 0], sizes = [1, 4], strides = [1, 1]} : vector<7x4xf32> to vector<1x4xf32>
    %18 = vector.broadcast %17 : vector<1x4xf32> to vector<16x4xf32>
    %19 = arith.mulf %16, %18 : vector<16x4xf32>
    %20 = arith.addf %15, %19 : vector<16x4xf32>
    %21 = vector.extract_strided_slice %14 {offsets = [1, 0], sizes = [16, 4], strides = [1, 1]} : vector<22x4xf32> to vector<16x4xf32>
    %22 = vector.extract_strided_slice %10 {offsets = [1, 0], sizes = [1, 4], strides = [1, 1]} : vector<7x4xf32> to vector<1x4xf32>
    %23 = vector.broadcast %22 : vector<1x4xf32> to vector<16x4xf32>
    %24 = arith.mulf %21, %23 : vector<16x4xf32>
    %25 = arith.addf %20, %24 : vector<16x4xf32>
    %26 = vector.extract_strided_slice %14 {offsets = [2, 0], sizes = [16, 4], strides = [1, 1]} : vector<22x4xf32> to vector<16x4xf32>
    %27 = vector.extract_strided_slice %10 {offsets = [2, 0], sizes = [1, 4], strides = [1, 1]} : vector<7x4xf32> to vector<1x4xf32>
    %28 = vector.broadcast %27 : vector<1x4xf32> to vector<16x4xf32>
    %29 = arith.mulf %26, %28 : vector<16x4xf32>
    %30 = arith.addf %25, %29 : vector<16x4xf32>
    %31 = vector.extract_strided_slice %14 {offsets = [3, 0], sizes = [16, 4], strides = [1, 1]} : vector<22x4xf32> to vector<16x4xf32>
    %32 = vector.extract_strided_slice %10 {offsets = [3, 0], sizes = [1, 4], strides = [1, 1]} : vector<7x4xf32> to vector<1x4xf32>
    %33 = vector.broadcast %32 : vector<1x4xf32> to vector<16x4xf32>
    %34 = arith.mulf %31, %33 : vector<16x4xf32>
    %35 = arith.addf %30, %34 : vector<16x4xf32>
    %36 = vector.extract_strided_slice %14 {offsets = [4, 0], sizes = [16, 4], strides = [1, 1]} : vector<22x4xf32> to vector<16x4xf32>
    %37 = vector.extract_strided_slice %10 {offsets = [4, 0], sizes = [1, 4], strides = [1, 1]} : vector<7x4xf32> to vector<1x4xf32>
    %38 = vector.broadcast %37 : vector<1x4xf32> to vector<16x4xf32>
    %39 = arith.mulf %36, %38 : vector<16x4xf32>
    %40 = arith.addf %35, %39 : vector<16x4xf32>
    %41 = vector.extract_strided_slice %14 {offsets = [5, 0], sizes = [16, 4], strides = [1, 1]} : vector<22x4xf32> to vector<16x4xf32>
    %42 = vector.extract_strided_slice %10 {offsets = [5, 0], sizes = [1, 4], strides = [1, 1]} : vector<7x4xf32> to vector<1x4xf32>
    %43 = vector.broadcast %42 : vector<1x4xf32> to vector<16x4xf32>
    %44 = arith.mulf %41, %43 : vector<16x4xf32>
    %45 = arith.addf %40, %44 : vector<16x4xf32>
    %46 = vector.extract_strided_slice %14 {offsets = [6, 0], sizes = [16, 4], strides = [1, 1]} : vector<22x4xf32> to vector<16x4xf32>
    %47 = vector.extract_strided_slice %10 {offsets = [6, 0], sizes = [1, 4], strides = [1, 1]} : vector<7x4xf32> to vector<1x4xf32>
    %48 = vector.broadcast %47 : vector<1x4xf32> to vector<16x4xf32>
    %49 = arith.mulf %46, %48 : vector<16x4xf32>
    %50 = arith.addf %45, %49 : vector<16x4xf32>
    %51 = vector.broadcast %11 : vector<1x4xf32> to vector<16x4xf32>
    %52 = arith.mulf %50, %51 : vector<16x4xf32>
    %53 = vector.broadcast %12 : vector<1x4xf32> to vector<16x4xf32>
    %54 = arith.addf %52, %53 : vector<16x4xf32>
    %cst_14 = arith.constant 3.000000e+00 : f32
    %55 = vector.broadcast %cst_14 : f32 to vector<16x4xf32>
    %56 = arith.addf %54, %55 : vector<16x4xf32>
    %cst_15 = arith.constant 0.000000e+00 : f32
    %cst_16 = arith.constant 6.000000e+00 : f32
    %57 = vector.broadcast %cst_15 : f32 to vector<16x4xf32>
    %58 = arith.maximumf %57, %56 : vector<16x4xf32>
    %59 = vector.broadcast %cst_16 : f32 to vector<16x4xf32>
    %60 = arith.minimumf %59, %58 : vector<16x4xf32>
    %61 = arith.mulf %54, %60 : vector<16x4xf32>
    %cst_17 = arith.constant 0.166666672 : f32
    %62 = vector.broadcast %cst_17 : f32 to vector<16x4xf32>
    %63 = arith.mulf %61, %62 : vector<16x4xf32>
    %cst_18 = arith.constant 0.000000e+00 : f32
    %64 = vector.broadcast %cst_18 : f32 to vector<3x4xf32>
    %65 = tpu.concatenate %64, %9, %64 in 0 : vector<3x4xf32>, vector<16x4xf32>, vector<3x4xf32> -> vector<22x4xf32>
    %cst_19 = arith.constant 0.000000e+00 : f32
    %66 = vector.broadcast %cst_19 : f32 to vector<16x4xf32>
    %67 = vector.extract_strided_slice %65 {offsets = [0, 0], sizes = [16, 4], strides = [1, 1]} : vector<22x4xf32> to vector<16x4xf32>
    %68 = vector.extract_strided_slice %10 {offsets = [0, 0], sizes = [1, 4], strides = [1, 1]} : vector<7x4xf32> to vector<1x4xf32>
    %69 = vector.broadcast %68 : vector<1x4xf32> to vector<16x4xf32>
    %70 = arith.mulf %67, %69 : vector<16x4xf32>
    %71 = arith.addf %66, %70 : vector<16x4xf32>
    %72 = vector.extract_strided_slice %65 {offsets = [1, 0], sizes = [16, 4], strides = [1, 1]} : vector<22x4xf32> to vector<16x4xf32>
    %73 = vector.extract_strided_slice %10 {offsets = [1, 0], sizes = [1, 4], strides = [1, 1]} : vector<7x4xf32> to vector<1x4xf32>
    %74 = vector.broadcast %73 : vector<1x4xf32> to vector<16x4xf32>
    %75 = arith.mulf %72, %74 : vector<16x4xf32>
    %76 = arith.addf %71, %75 : vector<16x4xf32>
    %77 = vector.extract_strided_slice %65 {offsets = [2, 0], sizes = [16, 4], strides = [1, 1]} : vector<22x4xf32> to vector<16x4xf32>
    %78 = vector.extract_strided_slice %10 {offsets = [2, 0], sizes = [1, 4], strides = [1, 1]} : vector<7x4xf32> to vector<1x4xf32>
    %79 = vector.broadcast %78 : vector<1x4xf32> to vector<16x4xf32>
    %80 = arith.mulf %77, %79 : vector<16x4xf32>
    %81 = arith.addf %76, %80 : vector<16x4xf32>
    %82 = vector.extract_strided_slice %65 {offsets = [3, 0], sizes = [16, 4], strides = [1, 1]} : vector<22x4xf32> to vector<16x4xf32>
    %83 = vector.extract_strided_slice %10 {offsets = [3, 0], sizes = [1, 4], strides = [1, 1]} : vector<7x4xf32> to vector<1x4xf32>
    %84 = vector.broadcast %83 : vector<1x4xf32> to vector<16x4xf32>
    %85 = arith.mulf %82, %84 : vector<16x4xf32>
    %86 = arith.addf %81, %85 : vector<16x4xf32>
    %87 = vector.extract_strided_slice %65 {offsets = [4, 0], sizes = [16, 4], strides = [1, 1]} : vector<22x4xf32> to vector<16x4xf32>
    %88 = vector.extract_strided_slice %10 {offsets = [4, 0], sizes = [1, 4], strides = [1, 1]} : vector<7x4xf32> to vector<1x4xf32>
    %89 = vector.broadcast %88 : vector<1x4xf32> to vector<16x4xf32>
    %90 = arith.mulf %87, %89 : vector<16x4xf32>
    %91 = arith.addf %86, %90 : vector<16x4xf32>
    %92 = vector.extract_strided_slice %65 {offsets = [5, 0], sizes = [16, 4], strides = [1, 1]} : vector<22x4xf32> to vector<16x4xf32>
    %93 = vector.extract_strided_slice %10 {offsets = [5, 0], sizes = [1, 4], strides = [1, 1]} : vector<7x4xf32> to vector<1x4xf32>
    %94 = vector.broadcast %93 : vector<1x4xf32> to vector<16x4xf32>
    %95 = arith.mulf %92, %94 : vector<16x4xf32>
    %96 = arith.addf %91, %95 : vector<16x4xf32>
    %97 = vector.extract_strided_slice %65 {offsets = [6, 0], sizes = [16, 4], strides = [1, 1]} : vector<22x4xf32> to vector<16x4xf32>
    %98 = vector.extract_strided_slice %10 {offsets = [6, 0], sizes = [1, 4], strides = [1, 1]} : vector<7x4xf32> to vector<1x4xf32>
    %99 = vector.broadcast %98 : vector<1x4xf32> to vector<16x4xf32>
    %100 = arith.mulf %97, %99 : vector<16x4xf32>
    %101 = arith.addf %96, %100 : vector<16x4xf32>
    %102 = vector.broadcast %11 : vector<1x4xf32> to vector<16x4xf32>
    %103 = arith.mulf %101, %102 : vector<16x4xf32>
    %104 = vector.broadcast %12 : vector<1x4xf32> to vector<16x4xf32>
    %105 = arith.addf %103, %104 : vector<16x4xf32>
    %cst_20 = arith.constant 3.000000e+00 : f32
    %106 = vector.broadcast %cst_20 : f32 to vector<16x4xf32>
    %107 = arith.addf %105, %106 : vector<16x4xf32>
    %cst_21 = arith.constant 0.000000e+00 : f32
    %cst_22 = arith.constant 6.000000e+00 : f32
    %108 = vector.broadcast %cst_21 : f32 to vector<16x4xf32>
    %109 = arith.maximumf %108, %107 : vector<16x4xf32>
    %110 = vector.broadcast %cst_22 : f32 to vector<16x4xf32>
    %111 = arith.minimumf %110, %109 : vector<16x4xf32>
    %112 = arith.mulf %105, %111 : vector<16x4xf32>
    %cst_23 = arith.constant 0.166666672 : f32
    %113 = vector.broadcast %cst_23 : f32 to vector<16x4xf32>
    %114 = arith.mulf %112, %113 : vector<16x4xf32>
    %cst_24 = arith.constant 0.000000e+00 : f32
    %115 = vector.broadcast %cst_24 : f32 to vector<3x4xf32>
    %116 = tpu.concatenate %115, %63, %115 in 0 : vector<3x4xf32>, vector<16x4xf32>, vector<3x4xf32> -> vector<22x4xf32>
    %cst_25 = arith.constant 0.000000e+00 : f32
    %117 = vector.broadcast %cst_25 : f32 to vector<16x4xf32>
    %118 = vector.extract_strided_slice %116 {offsets = [0, 0], sizes = [16, 4], strides = [1, 1]} : vector<22x4xf32> to vector<16x4xf32>
    %119 = vector.extract_strided_slice %10 {offsets = [0, 0], sizes = [1, 4], strides = [1, 1]} : vector<7x4xf32> to vector<1x4xf32>
    %120 = vector.broadcast %119 : vector<1x4xf32> to vector<16x4xf32>
    %121 = arith.mulf %118, %120 : vector<16x4xf32>
    %122 = arith.addf %117, %121 : vector<16x4xf32>
    %123 = vector.extract_strided_slice %116 {offsets = [1, 0], sizes = [16, 4], strides = [1, 1]} : vector<22x4xf32> to vector<16x4xf32>
    %124 = vector.extract_strided_slice %10 {offsets = [1, 0], sizes = [1, 4], strides = [1, 1]} : vector<7x4xf32> to vector<1x4xf32>
    %125 = vector.broadcast %124 : vector<1x4xf32> to vector<16x4xf32>
    %126 = arith.mulf %123, %125 : vector<16x4xf32>
    %127 = arith.addf %122, %126 : vector<16x4xf32>
    %128 = vector.extract_strided_slice %116 {offsets = [2, 0], sizes = [16, 4], strides = [1, 1]} : vector<22x4xf32> to vector<16x4xf32>
    %129 = vector.extract_strided_slice %10 {offsets = [2, 0], sizes = [1, 4], strides = [1, 1]} : vector<7x4xf32> to vector<1x4xf32>
    %130 = vector.broadcast %129 : vector<1x4xf32> to vector<16x4xf32>
    %131 = arith.mulf %128, %130 : vector<16x4xf32>
    %132 = arith.addf %127, %131 : vector<16x4xf32>
    %133 = vector.extract_strided_slice %116 {offsets = [3, 0], sizes = [16, 4], strides = [1, 1]} : vector<22x4xf32> to vector<16x4xf32>
    %134 = vector.extract_strided_slice %10 {offsets = [3, 0], sizes = [1, 4], strides = [1, 1]} : vector<7x4xf32> to vector<1x4xf32>
    %135 = vector.broadcast %134 : vector<1x4xf32> to vector<16x4xf32>
    %136 = arith.mulf %133, %135 : vector<16x4xf32>
    %137 = arith.addf %132, %136 : vector<16x4xf32>
    %138 = vector.extract_strided_slice %116 {offsets = [4, 0], sizes = [16, 4], strides = [1, 1]} : vector<22x4xf32> to vector<16x4xf32>
    %139 = vector.extract_strided_slice %10 {offsets = [4, 0], sizes = [1, 4], strides = [1, 1]} : vector<7x4xf32> to vector<1x4xf32>
    %140 = vector.broadcast %139 : vector<1x4xf32> to vector<16x4xf32>
    %141 = arith.mulf %138, %140 : vector<16x4xf32>
    %142 = arith.addf %137, %141 : vector<16x4xf32>
    %143 = vector.extract_strided_slice %116 {offsets = [5, 0], sizes = [16, 4], strides = [1, 1]} : vector<22x4xf32> to vector<16x4xf32>
    %144 = vector.extract_strided_slice %10 {offsets = [5, 0], sizes = [1, 4], strides = [1, 1]} : vector<7x4xf32> to vector<1x4xf32>
    %145 = vector.broadcast %144 : vector<1x4xf32> to vector<16x4xf32>
    %146 = arith.mulf %143, %145 : vector<16x4xf32>
    %147 = arith.addf %142, %146 : vector<16x4xf32>
    %148 = vector.extract_strided_slice %116 {offsets = [6, 0], sizes = [16, 4], strides = [1, 1]} : vector<22x4xf32> to vector<16x4xf32>
    %149 = vector.extract_strided_slice %10 {offsets = [6, 0], sizes = [1, 4], strides = [1, 1]} : vector<7x4xf32> to vector<1x4xf32>
    %150 = vector.broadcast %149 : vector<1x4xf32> to vector<16x4xf32>
    %151 = arith.mulf %148, %150 : vector<16x4xf32>
    %152 = arith.addf %147, %151 : vector<16x4xf32>
    %153 = arith.negf %152 : vector<16x4xf32>
    %154 = math.exp %153 : vector<16x4xf32>
    %cst_26 = arith.constant 1.000000e+00 : f32
    %155 = vector.broadcast %cst_26 : f32 to vector<16x4xf32>
    %156 = arith.addf %155, %154 : vector<16x4xf32>
    %157 = arith.divf %155, %156 : vector<16x4xf32>
    %cst_27 = arith.constant 0.000000e+00 : f32
    %158 = vector.broadcast %cst_27 : f32 to vector<3x4xf32>
    %159 = tpu.concatenate %158, %114, %158 in 0 : vector<3x4xf32>, vector<16x4xf32>, vector<3x4xf32> -> vector<22x4xf32>
    %cst_28 = arith.constant 0.000000e+00 : f32
    %160 = vector.broadcast %cst_28 : f32 to vector<16x4xf32>
    %161 = vector.extract_strided_slice %159 {offsets = [0, 0], sizes = [16, 4], strides = [1, 1]} : vector<22x4xf32> to vector<16x4xf32>
    %162 = vector.extract_strided_slice %10 {offsets = [0, 0], sizes = [1, 4], strides = [1, 1]} : vector<7x4xf32> to vector<1x4xf32>
    %163 = vector.broadcast %162 : vector<1x4xf32> to vector<16x4xf32>
    %164 = arith.mulf %161, %163 : vector<16x4xf32>
    %165 = arith.addf %160, %164 : vector<16x4xf32>
    %166 = vector.extract_strided_slice %159 {offsets = [1, 0], sizes = [16, 4], strides = [1, 1]} : vector<22x4xf32> to vector<16x4xf32>
    %167 = vector.extract_strided_slice %10 {offsets = [1, 0], sizes = [1, 4], strides = [1, 1]} : vector<7x4xf32> to vector<1x4xf32>
    %168 = vector.broadcast %167 : vector<1x4xf32> to vector<16x4xf32>
    %169 = arith.mulf %166, %168 : vector<16x4xf32>
    %170 = arith.addf %165, %169 : vector<16x4xf32>
    %171 = vector.extract_strided_slice %159 {offsets = [2, 0], sizes = [16, 4], strides = [1, 1]} : vector<22x4xf32> to vector<16x4xf32>
    %172 = vector.extract_strided_slice %10 {offsets = [2, 0], sizes = [1, 4], strides = [1, 1]} : vector<7x4xf32> to vector<1x4xf32>
    %173 = vector.broadcast %172 : vector<1x4xf32> to vector<16x4xf32>
    %174 = arith.mulf %171, %173 : vector<16x4xf32>
    %175 = arith.addf %170, %174 : vector<16x4xf32>
    %176 = vector.extract_strided_slice %159 {offsets = [3, 0], sizes = [16, 4], strides = [1, 1]} : vector<22x4xf32> to vector<16x4xf32>
    %177 = vector.extract_strided_slice %10 {offsets = [3, 0], sizes = [1, 4], strides = [1, 1]} : vector<7x4xf32> to vector<1x4xf32>
    %178 = vector.broadcast %177 : vector<1x4xf32> to vector<16x4xf32>
    %179 = arith.mulf %176, %178 : vector<16x4xf32>
    %180 = arith.addf %175, %179 : vector<16x4xf32>
    %181 = vector.extract_strided_slice %159 {offsets = [4, 0], sizes = [16, 4], strides = [1, 1]} : vector<22x4xf32> to vector<16x4xf32>
    %182 = vector.extract_strided_slice %10 {offsets = [4, 0], sizes = [1, 4], strides = [1, 1]} : vector<7x4xf32> to vector<1x4xf32>
    %183 = vector.broadcast %182 : vector<1x4xf32> to vector<16x4xf32>
    %184 = arith.mulf %181, %183 : vector<16x4xf32>
    %185 = arith.addf %180, %184 : vector<16x4xf32>
    %186 = vector.extract_strided_slice %159 {offsets = [5, 0], sizes = [16, 4], strides = [1, 1]} : vector<22x4xf32> to vector<16x4xf32>
    %187 = vector.extract_strided_slice %10 {offsets = [5, 0], sizes = [1, 4], strides = [1, 1]} : vector<7x4xf32> to vector<1x4xf32>
    %188 = vector.broadcast %187 : vector<1x4xf32> to vector<16x4xf32>
    %189 = arith.mulf %186, %188 : vector<16x4xf32>
    %190 = arith.addf %185, %189 : vector<16x4xf32>
    %191 = vector.extract_strided_slice %159 {offsets = [6, 0], sizes = [16, 4], strides = [1, 1]} : vector<22x4xf32> to vector<16x4xf32>
    %192 = vector.extract_strided_slice %10 {offsets = [6, 0], sizes = [1, 4], strides = [1, 1]} : vector<7x4xf32> to vector<1x4xf32>
    %193 = vector.broadcast %192 : vector<1x4xf32> to vector<16x4xf32>
    %194 = arith.mulf %191, %193 : vector<16x4xf32>
    %195 = arith.addf %190, %194 : vector<16x4xf32>
    %196 = arith.negf %195 : vector<16x4xf32>
    %197 = math.exp %196 : vector<16x4xf32>
    %cst_29 = arith.constant 1.000000e+00 : f32
    %198 = vector.broadcast %cst_29 : f32 to vector<16x4xf32>
    %199 = arith.addf %198, %197 : vector<16x4xf32>
    %200 = arith.divf %198, %199 : vector<16x4xf32>
    %201 = tpu.transpose %157, [1, 0] : vector<16x4xf32> -> vector<4x16xf32>
    %202 = tpu.transpose %200, [1, 0] : vector<16x4xf32> -> vector<4x16xf32>
    %203 = vector.shape_cast %202 : vector<4x16xf32> to vector<4x1x16xf32>
    %204 = vector.broadcast %203 : vector<4x1x16xf32> to vector<4x16x16xf32>
    %205 = arith.mulf %1, %204 : vector<4x16x16xf32>
    %206 = vector.shape_cast %201 : vector<4x16xf32> to vector<4x16x1xf32>
    %207 = vector.broadcast %206 : vector<4x16x1xf32> to vector<4x16x16xf32>
    %208 = arith.mulf %205, %207 : vector<4x16x16xf32>
    %c0_30 = arith.constant 0 : index
    %c0_31 = arith.constant 0 : index
    %c0_32 = arith.constant 0 : index
    %c0_33 = arith.constant 0 : index
    %209 = vector.load %arg5[%c0_30, %c0_31, %c0_32, %c0_33] : memref<1x4x16x16xf32, #tpu.memory_space<vmem>>, vector<1x4x16x16xf32>
    %210 = vector.shape_cast %209 : vector<1x4x16x16xf32> to vector<4x16x16xf32>
    %211 = vector.shape_cast %208 : vector<4x16x16xf32> to vector<1x4x16x16xf32>
    tpu.vector_store %arg5[%c0_30, %c0_31, %c0_32, %c0_33], %211 {strides = array<i32>} : memref<1x4x16x16xf32, #tpu.memory_space<vmem>>, vector<1x4x16x16xf32>,
    return
  }
  func.func @transform_0(%arg0: i32) -> (i32, i32, i32, i32) {
    %c0_i32 = arith.constant 0 : i32
    %c0_i32_0 = arith.constant 0 : i32
    %c0_i32_1 = arith.constant 0 : i32
    %c0_i32_2 = arith.constant 0 : i32
    return %arg0, %c0_i32, %c0_i32_0, %c0_i32_1 : i32, i32, i32, i32
  }
  func.func @transform_1(%arg0: i32) -> (i32, i32) {
    %c0_i32 = arith.constant 0 : i32
    %c0_i32_0 = arith.constant 0 : i32
    %c0_i32_1 = arith.constant 0 : i32
    return %c0_i32, %c0_i32_0 : i32, i32
  }
  func.func @transform_2(%arg0: i32) -> (i32, i32) {
    %c0_i32 = arith.constant 0 : i32
    %c0_i32_0 = arith.constant 0 : i32
    %c0_i32_1 = arith.constant 0 : i32
    return %c0_i32, %c0_i32_0 : i32, i32
  }
  func.func @transform_3(%arg0: i32) -> (i32, i32) {
    %c0_i32 = arith.constant 0 : i32
    %c0_i32_0 = arith.constant 0 : i32
    %c0_i32_1 = arith.constant 0 : i32
    return %c0_i32, %c0_i32_0 : i32, i32
  }
  func.func @transform_4(%arg0: i32) -> (i32, i32, i32, i32) {
    %c0_i32 = arith.constant 0 : i32
    %c0_i32_0 = arith.constant 0 : i32
    %c0_i32_1 = arith.constant 0 : i32
    %c0_i32_2 = arith.constant 0 : i32
    return %arg0, %c0_i32, %c0_i32_0, %c0_i32_1 : i32, i32, i32, i32
  }
}

</mosaic_0001>

<llo_original>
// kernel: tpu_custom_call.1
$region0: #{tpu_custom_call.1}
  #allocation0 [shape = 'u32[]', space=smem, size = 0x4, offset = 0x4, fixed_abs, tag = 'smem constant byte address 0x4 - core index']
  #allocation1 [shape = 'u32[144,128]{1,0:T(1,128)}', space=vmem, size = 0x12000, scoped, tag = 'internal scratch']
  %s0 = inlined_call_operand.hbm [shape: f32[2,4,16,16], index: 0, kind: input, shape index: {}]
  %s1 = inlined_call_operand.vmem [shape: f32[7,4], index: 1, kind: input, shape index: {}]
  %s2 = inlined_call_operand.vmem [shape: f32[1,4], index: 2, kind: input, shape index: {}]
  %s3 = inlined_call_operand.vmem [shape: f32[1,4], index: 3, kind: input, shape index: {}]
  %s4 = inlined_call_operand.hbm [shape: f32[2,4,16,16], index: 4, kind: output, shape index: {}]
  %s5 = sld [smem:[#allocation0]]
  $region53: #{tpu_custom_call.1} parent=0
    _
  %s7 = ssub.s32 1, %s5
  %s8 = scalar_select 0, %s7, %s5
  $region1: #{tpu_custom_call.1} parent=0
    #allocation2 [shape = 'u8[65536]{0}', space=vmem, size = 0x10000, scoped, tag = 'input window, operand 0']
    #allocation3 [shape = 's32[2]{0}', space=sflag, size = 0x8, scoped, tag = 'scoped memory for tpu_custom_call.1']
    #allocation4 [shape = 's32[2]{0}', space=sflag, size = 0x8, scoped, tag = 'scoped memory for tpu_custom_call.1']
    #allocation5 [shape = 'u8[65536]{0}', space=vmem, size = 0x10000, scoped, tag = 'output window, operand 0']
    %9 = vsyncpa [#allocation3], 0
    %s10 = scalar_lea.sflag [#allocation3], 1
    %11 = vsyncpa %s10, 0
    %12 = vsyncpa [#allocation4], 0
    %s13 = scalar_lea.sflag [#allocation4], 1
    %14 = vsyncpa %s13, 0
    loop: start=0, step=1, limit=4
    $region2: #{tpu_custom_call.1} parent=1 // loop_pre_header
      _
    $region3: #{tpu_custom_call.1} parent=1 // loop_header
      %s16 = sphi 0, %s20
      %p17 = scmp.ge.s32.totalorder %s16, 4
      %s26 = sphi 0, %s28
      %s29 = sphi 0, %s26
      %s30 = sphi 0, %s29
      %s46 = sphi 0, %s30
      %s50 = sphi 0, %s50
      %s52 = sphi 0, %s50
      %s53 = sphi 0, %s52
      %s67 = sphi 0, %s53
      %s71 = sphi 0, %s71
      %s73 = sphi 0, %s71
      %s74 = sphi 0, %s73
      %s88 = sphi 0, %s74
      %s92 = sphi 0, %s92
      %s94 = sphi 0, %s92
      %s95 = sphi 0, %s94
      %s109 = sphi 0, %s95
      %s115 = sphi 0, %s117
      %s118 = sphi 0, %s115
      %s119 = sphi 0, %s118
      %s135 = sphi 0, %s119
    $region4: #{tpu_custom_call.1} parent=1 // loop_header_branch
      %19 = sbr.rel (%p17) target = $region8
    $region5: #{tpu_custom_call.1} parent=1 // loop_body
      %s21 = ssub.s32 %s16, 1
      %s22 = ssub.s32 %s16, 2
      %s23 = sadd.s32 %s16, 1
      %s24 = ssub.s32 %s16, %s23
      %p25 = scmp.eq.s32.totalorder %s24, 0
      %s27 = sadd.s32 %s26, 1
      %s28 = scalar_select %p25, %s26, %s27
      %p31 = pneg %p25
      %p32 = scmp.eq.s32.totalorder %s16, 1
      %p33 = por %p31, %p32
      %p34 = scmp.ne.s32.totalorder %s26, %s29
      %p35 = scmp.eq.s32.totalorder %s16, 0
      %p36 = por %p34, %p35
      %p37 = scmp.ne.s32.totalorder %s26, %s29
      %p38 = scmp.eq.s32.totalorder %s21, 1
      %p39 = por %p37, %p38
      %p40 = scmp.ne.s32.totalorder %s29, %s30
      %p41 = scmp.eq.s32.totalorder %s21, 0
      %p42 = por %p40, %p41
      %p43 = scmp.ne.s32.totalorder %s29, %s30
      %p44 = scmp.eq.s32.totalorder %s22, 1
      %p45 = por %p43, %p44
      %p47 = scmp.ne.s32.totalorder %s30, %s46
      %p48 = scmp.eq.s32.totalorder %s22, 0
      %p49 = por %p47, %p48
      %s51 = sadd.s32 %s50, 1
      %p54 = scmp.eq.s32.totalorder %s16, 1
      %p55 = scmp.ne.s32.totalorder %s50, %s52
      %p56 = scmp.eq.s32.totalorder %s16, 0
      %p57 = por %p55, %p56
      %p58 = scmp.ne.s32.totalorder %s50, %s52
      %p59 = scmp.eq.s32.totalorder %s21, 1
      %p60 = por %p58, %p59
      %p61 = scmp.ne.s32.totalorder %s52, %s53
      %p62 = scmp.eq.s32.totalorder %s21, 0
      %p63 = por %p61, %p62
      %p64 = scmp.ne.s32.totalorder %s52, %s53
      %p65 = scmp.eq.s32.totalorder %s22, 1
      %p66 = por %p64, %p65
      %p68 = scmp.ne.s32.totalorder %s53, %s67
      %p69 = scmp.eq.s32.totalorder %s22, 0
      %p70 = por %p68, %p69
      %s72 = sadd.s32 %s71, 1
      %p75 = scmp.eq.s32.totalorder %s16, 1
      %p76 = scmp.ne.s32.totalorder %s71, %s73
      %p77 = scmp.eq.s32.totalorder %s16, 0
      %p78 = por %p76, %p77
      %p79 = scmp.ne.s32.totalorder %s71, %s73
      %p80 = scmp.eq.s32.totalorder %s21, 1
      %p81 = por %p79, %p80
      %p82 = scmp.ne.s32.totalorder %s73, %s74
      %p83 = scmp.eq.s32.totalorder %s21, 0
      %p84 = por %p82, %p83
      %p85 = scmp.ne.s32.totalorder %s73, %s74
      %p86 = scmp.eq.s32.totalorder %s22, 1
      %p87 = por %p85, %p86
      %p89 = scmp.ne.s32.totalorder %s74, %s88
      %p90 = scmp.eq.s32.totalorder %s22, 0
      %p91 = por %p89, %p90
      %s93 = sadd.s32 %s92, 1
      %p96 = scmp.eq.s32.totalorder %s16, 1
      %p97 = scmp.ne.s32.totalorder %s92, %s94
      %p98 = scmp.eq.s32.totalorder %s16, 0
      %p99 = por %p97, %p98
      %p100 = scmp.ne.s32.totalorder %s92, %s94
      %p101 = scmp.eq.s32.totalorder %s21, 1
      %p102 = por %p100, %p101
      %p103 = scmp.ne.s32.totalorder %s94, %s95
      %p104 = scmp.eq.s32.totalorder %s21, 0
      %p105 = por %p103, %p104
      %p106 = scmp.ne.s32.totalorder %s94, %s95
      %p107 = scmp.eq.s32.totalorder %s22, 1
      %p108 = por %p106, %p107
      %p110 = scmp.ne.s32.totalorder %s95, %s109
      %p111 = scmp.eq.s32.totalorder %s22, 0
      %p112 = por %p110, %p111
      %s113 = ssub.s32 %s16, %s23
      %p114 = scmp.eq.s32.totalorder %s113, 0
      %s116 = sadd.s32 %s115, 1
      %s117 = scalar_select %p114, %s115, %s116
      %p120 = pneg %p114
      %p121 = scmp.eq.s32.totalorder %s16, 1
      %p122 = por %p120, %p121
      %p123 = scmp.ne.s32.totalorder %s115, %s118
      %p124 = scmp.eq.s32.totalorder %s16, 0
      %p125 = por %p123, %p124
      %p126 = scmp.ne.s32.totalorder %s115, %s118
      %p127 = scmp.eq.s32.totalorder %s21, 1
      %p128 = por %p126, %p127
      %p129 = scmp.ne.s32.totalorder %s118, %s119
      %p130 = scmp.eq.s32.totalorder %s21, 0
      %p131 = por %p129, %p130
      %p132 = scmp.ne.s32.totalorder %s118, %s119
      %p133 = scmp.eq.s32.totalorder %s22, 1
      %p134 = por %p132, %p133
      %p136 = scmp.ne.s32.totalorder %s119, %s135
      %p137 = scmp.eq.s32.totalorder %s22, 0
      %p138 = por %p136, %p137
      %p139 = scmp.le.s32.totalorder 1, %s16
      %p140 = scmp.lt.s32.totalorder %s16, 3
      %p141 = pnand %p139, %p140
      %p142 = pneg %p141
      // Predicated region
      $region9: #{tpu_custom_call.1} parent=5 // pred_check
        _
      $region10: #{tpu_custom_call.1} parent=5 // pred_check_branch
        %144 = sbr.rel (%p141) target = $region12
      $region11: #{tpu_custom_call.1} parent=5 // pred_region
        %s145 = ssub.s32 %s16, 1
        // Predicated region
        $region13: #{tpu_custom_call.1} parent=11 // pred_check
          %p146 = pneg %p63
        $region14: #{tpu_custom_call.1} parent=11 // pred_check_branch
          %148 = sbr.rel (%p146) target = $region16
        $region15: #{tpu_custom_call.1} parent=11 // pred_region
          _
        $region16: #{tpu_custom_call.1} parent=11 // pred_fallthru
          _
        // Predicated region
        $region17: #{tpu_custom_call.1} parent=11 // pred_check
          %p149 = pneg %p84
        $region18: #{tpu_custom_call.1} parent=11 // pred_check_branch
          %151 = sbr.rel (%p149) target = $region20
        $region19: #{tpu_custom_call.1} parent=11 // pred_region
          _
        $region20: #{tpu_custom_call.1} parent=11 // pred_fallthru
          _
        // Predicated region
        $region21: #{tpu_custom_call.1} parent=11 // pred_check
          %p152 = pneg %p105
        $region22: #{tpu_custom_call.1} parent=11 // pred_check_branch
          %154 = sbr.rel (%p152) target = $region24
        $region23: #{tpu_custom_call.1} parent=11 // pred_region
          _
        $region24: #{tpu_custom_call.1} parent=11 // pred_fallthru
          _
      $region12: #{tpu_custom_call.1} parent=5 // pred_fallthru
        _
      %p155 = scmp.lt.s32.totalorder %s16, 2
      // Predicated region
      $region25: #{tpu_custom_call.1} parent=5 // pred_check
        %p156 = pneg %p155
      $region26: #{tpu_custom_call.1} parent=5 // pred_check_branch
        %158 = sbr.rel (%p156) target = $region28
      $region27: #{tpu_custom_call.1} parent=5 // pred_region
        // Predicated region
        $region29: #{tpu_custom_call.1} parent=27 // pred_check
          %p159 = pneg %p36
        $region30: #{tpu_custom_call.1} parent=27 // pred_check_branch
          %161 = sbr.rel (%p159) target = $region32
        $region31: #{tpu_custom_call.1} parent=27 // pred_region
          %s162 = sand.u32 %s26, 1
          %s163 = scalar_lea.sflag [#allocation3], %s162
          %s164 = sand.u32 %s26, 1
          %s165 = smul.addr %s164, 64
          %s166 = scalar_lea.vmem [#allocation2], %s165
          %s168 = ssub.s32 1024, 1024
          %169 = vsyncadd %s163, %s168
          %s170 = smul.addr %s16, 8
          %s171 = smul.addr %s170, 128
          %s172 = scalar_lea.hbm %s0, %s171
          %s173 = sshll.u32 %s166, 4
          %s174 = int_to_ptr.vmem [resolvable:$true] %s173
          %179 = dma.hbm_to_vmem [thread:$0]  %s172, 1024, %s174, %s163, 128, 128, 8
        $region32: #{tpu_custom_call.1} parent=27 // pred_fallthru
          _
      $region28: #{tpu_custom_call.1} parent=5 // pred_fallthru
        _
      %p180 = scmp.le.s32.totalorder 1, %s16
      %p181 = scmp.lt.s32.totalorder %s16, 3
      %p182 = pnand %p180, %p181
      %p183 = pneg %p182
      // Predicated region
      $region33: #{tpu_custom_call.1} parent=5 // pred_check
        _
      $region34: #{tpu_custom_call.1} parent=5 // pred_check_branch
        %185 = sbr.rel (%p182) target = $region36
      $region35: #{tpu_custom_call.1} parent=5 // pred_region
        %s186 = ssub.s32 %s16, 1
        %s187 = sand.u32 %s29, 1
        %s188 = scalar_lea.sflag [#allocation3], %s187
        %s189 = sand.u32 %s29, 1
        %s190 = smul.addr %s189, 64
        %s191 = scalar_lea.vmem [#allocation2], %s190
        // Predicated region
        $region37: #{tpu_custom_call.1} parent=35 // pred_check
          %p192 = pneg %p42
        $region38: #{tpu_custom_call.1} parent=35 // pred_check_branch
          %194 = sbr.rel (%p192) target = $region40
        $region39: #{tpu_custom_call.1} parent=35 // pred_region
          %195 = dma.done %s188, 1024
        $region40: #{tpu_custom_call.1} parent=35 // pred_fallthru
          _
        %s196 = sand.u32 %s29, 1
        %s197 = scalar_lea.sflag [#allocation3], %s196
        %s198 = sand.u32 %s29, 1
        %s199 = smul.addr %s198, 64
        %s200 = scalar_lea.vmem [#allocation2], %s199
        %p201 = pneg %p42
        %p202 = pneg %p39
        %p203 = pneg %p63
        %p204 = pneg %p60
        %p205 = pneg %p84
        %p206 = pneg %p81
        %p207 = pneg %p105
        %p208 = pneg %p102
        %p209 = pneg %p131
        %p210 = pneg %p128
        %s211 = sand.u32 %s118, 1
        %s212 = scalar_lea.sflag [#allocation4], %s211
        %s213 = sand.u32 %s118, 1
        %s214 = smul.addr %s213, 64
        %s215 = scalar_lea.vmem [#allocation5], %s214
        %v216 = vld [vmem:[%s191] sm:$0xff]
        %v217 = vld [vmem:[%s191 + $0x8] sm:$0xff]
        %v218 = vld [vmem:[%s191 + $0x10] sm:$0xff]
        %v219 = vld [vmem:[%s191 + $0x18] sm:$0xff]
        %v220 = vld [vmem:[%s191 + $0x20] sm:$0xff]
        %v221 = vld [vmem:[%s191 + $0x28] sm:$0xff]
        %v222 = vld [vmem:[%s191 + $0x30] sm:$0xff]
        %v223 = vld [vmem:[%s191 + $0x38] sm:$0xff]
        %vm224 = vcmask 130048
        %v225 = vsel %vm224, %v216, 0.0
        %226 = vadd.xlane.f32.xlu0 %v225
        %v227 = vpop.xlane.xlu0 %226
        %v228 = vsel %vm224, %v217, 0.0
        %229 = vadd.xlane.f32.xlu0 %v228
        %v230 = vpop.xlane.xlu0 %229
        %v231 = vsel %vm224, %v218, 0.0
        %232 = vadd.xlane.f32.xlu0 %v231
        %v233 = vpop.xlane.xlu0 %232
        %v234 = vsel %vm224, %v219, 0.0
        %235 = vadd.xlane.f32.xlu0 %v234
        %v236 = vpop.xlane.xlu0 %235
        %v237 = vsel %vm224, %v220, 0.0
        %238 = vadd.xlane.f32.xlu0 %v237
        %v239 = vpop.xlane.xlu0 %238
        %v240 = vsel %vm224, %v221, 0.0
        %241 = vadd.xlane.f32.xlu0 %v240
        %v242 = vpop.xlane.xlu0 %241
        %v243 = vsel %vm224, %v222, 0.0
        %244 = vadd.xlane.f32.xlu0 %v243
        %v245 = vpop.xlane.xlu0 %244
        %v246 = vsel %vm224, %v223, 0.0
        %247 = vadd.xlane.f32.xlu0 %v246
        %v248 = vpop.xlane.xlu0 %247
        %v249 = vrcp.pop 16.0
        %v250 = vmul.f32 %v227, %v249
        %v251 = vmul.f32 %v230, %v249
        %v252 = vmul.f32 %v233, %v249
        %v253 = vmul.f32 %v236, %v249
        %v254 = vmul.f32 %v239, %v249
        %v255 = vmul.f32 %v242, %v249
        %v256 = vmul.f32 %v245, %v249
        %v257 = vmul.f32 %v248, %v249
        %v266 = vlaneseq
        %v267 = vand.u32 %v266, 127
        %v268 = vlaneseq
        %v269 = vshrl.u32 %v268, 7
        %v270 = vsub.s32 %v267, %v269
        %v271 = vrot.slane %v250, %v270
        %v272 = vadd.s32 %v267, 4294967288
        %v273 = vlaneseq
        %v274 = vshrl.u32 %v273, 7
        %v275 = vsub.s32 %v272, %v274
        %v276 = vrot.slane %v251, %v275
        %vm277 = vcmask 130112
        %v278 = vsel %vm277, %v276, %v271
        %v279 = vlaneseq
        %v280 = vshrl.u32 %v279, 7
        %v281 = vsub.s32 %v267, %v280
        %v282 = vrot.slane %v252, %v281
        %v283 = vlaneseq
        %v284 = vshrl.u32 %v283, 7
        %v285 = vsub.s32 %v272, %v284
        %v286 = vrot.slane %v253, %v285
        %v287 = vsel %vm277, %v286, %v282
        %v288 = vlaneseq
        %v289 = vshrl.u32 %v288, 7
        %v290 = vsub.s32 %v267, %v289
        %v291 = vrot.slane %v254, %v290
        %v292 = vlaneseq
        %v293 = vshrl.u32 %v292, 7
        %v294 = vsub.s32 %v272, %v293
        %v295 = vrot.slane %v255, %v294
        %v296 = vsel %vm277, %v295, %v291
        %v297 = vlaneseq
        %v298 = vshrl.u32 %v297, 7
        %v299 = vsub.s32 %v267, %v298
        %v300 = vrot.slane %v256, %v299
        %v301 = vlaneseq
        %v302 = vshrl.u32 %v301, 7
        %v303 = vsub.s32 %v272, %v302
        %v304 = vrot.slane %v257, %v303
        %v305 = vsel %vm277, %v304, %v300
        %vm306 = vcmask 1041409
        %v307 = vsel %vm306, %v287, %v278
        %vm308 = vcmask 1042434
        %v309 = vsel %vm308, %v296, %v307
        %vm310 = vcmask 1043459
        %v311 = vsel %vm310, %v305, %v309
        %313 = vxpose.xlu0.b32.start [1/16] %v311, 128
        %314 = vxpose.xlu0.b32.cont [2/16] 0.0, 128
        %315 = vxpose.xlu0.b32.cont [3/16] 0.0, 128
        %316 = vxpose.xlu0.b32.cont [4/16] 0.0, 128
        %317 = vxpose.xlu0.b32.cont [5/16] 0.0, 128
        %318 = vxpose.xlu0.b32.cont [6/16] 0.0, 128
        %319 = vxpose.xlu0.b32.cont [7/16] 0.0, 128
        %320 = vxpose.xlu0.b32.cont [8/16] 0.0, 128
        %321 = vxpose.xlu0.b32.cont [9/16] 0.0, 128
        %322 = vxpose.xlu0.b32.cont [10/16] 0.0, 128
        %323 = vxpose.xlu0.b32.cont [11/16] 0.0, 128
        %324 = vxpose.xlu0.b32.cont [12/16] 0.0, 128
        %325 = vxpose.xlu0.b32.cont [13/16] 0.0, 128
        %326 = vxpose.xlu0.b32.cont [14/16] 0.0, 128
        %327 = vxpose.xlu0.b32.cont [15/16] 0.0, 128
        %328 = vxpose.xlu0.b32.end [16/16] 0.0, 128
        %v329 = vpop.trf.xlu0
        %v330 = vpop.trf.xlu0
        %v331 = vpop.trf.xlu0
        %v332 = vpop.trf.xlu0
        %v333 = vpop.trf.xlu0
        %v334 = vpop.trf.xlu0
        %v335 = vpop.trf.xlu0
        %v336 = vpop.trf.xlu0
        %v337 = vpop.trf.xlu0
        %v338 = vpop.trf.xlu0
        %v339 = vpop.trf.xlu0
        %v340 = vpop.trf.xlu0
        %v341 = vpop.trf.xlu0
        %v342 = vpop.trf.xlu0
        %v343 = vpop.trf.xlu0
        %v344 = vpop.trf.xlu0
        %v345 = vadd.f32 %v225, %v228
        %v346 = vrot.slane %v345, 4
        %v347 = vadd.f32 %v345, %v346
        %v348 = vrot.slane %v347, 2
        %v349 = vadd.f32 %v347, %v348
        %v350 = vrot.slane %v349, 1
        %v351 = vadd.f32 %v349, %v350
        %v352 = vadd.f32 %v231, %v234
        %v353 = vrot.slane %v352, 4
        %v354 = vadd.f32 %v352, %v353
        %v355 = vrot.slane %v354, 2
        %v356 = vadd.f32 %v354, %v355
        %v357 = vrot.slane %v356, 1
        %v358 = vadd.f32 %v356, %v357
        %v359 = vadd.f32 %v237, %v240
        %v360 = vrot.slane %v359, 4
        %v361 = vadd.f32 %v359, %v360
        %v362 = vrot.slane %v361, 2
        %v363 = vadd.f32 %v361, %v362
        %v364 = vrot.slane %v363, 1
        %v365 = vadd.f32 %v363, %v364
        %v366 = vadd.f32 %v243, %v246
        %v367 = vrot.slane %v366, 4
        %v368 = vadd.f32 %v366, %v367
        %v369 = vrot.slane %v368, 2
        %v370 = vadd.f32 %v368, %v369
        %v371 = vrot.slane %v370, 1
        %v372 = vadd.f32 %v370, %v371
        %v373 = vmul.f32 %v351, %v249
        %v374 = vmul.f32 %v358, %v249
        %v375 = vmul.f32 %v365, %v249
        %v376 = vmul.f32 %v372, %v249
        %v381 = vsel %vm306, %v374, %v373
        %v382 = vsel %vm308, %v375, %v381
        %v383 = vsel %vm310, %v376, %v382
        %385 = vxpose.xlu0.b32.start [1/16] %v383, 128
        %386 = vxpose.xlu0.b32.cont [2/16] 0.0, 128
        %387 = vxpose.xlu0.b32.cont [3/16] 0.0, 128
        %388 = vxpose.xlu0.b32.cont [4/16] 0.0, 128
        %389 = vxpose.xlu0.b32.cont [5/16] 0.0, 128
        %390 = vxpose.xlu0.b32.cont [6/16] 0.0, 128
        %391 = vxpose.xlu0.b32.cont [7/16] 0.0, 128
        %392 = vxpose.xlu0.b32.cont [8/16] 0.0, 128
        %393 = vxpose.xlu0.b32.cont [9/16] 0.0, 128
        %394 = vxpose.xlu0.b32.cont [10/16] 0.0, 128
        %395 = vxpose.xlu0.b32.cont [11/16] 0.0, 128
        %396 = vxpose.xlu0.b32.cont [12/16] 0.0, 128
        %397 = vxpose.xlu0.b32.cont [13/16] 0.0, 128
        %398 = vxpose.xlu0.b32.cont [14/16] 0.0, 128
        %399 = vxpose.xlu0.b32.cont [15/16] 0.0, 128
        %400 = vxpose.xlu0.b32.end [16/16] 0.0, 128
        %v401 = vpop.trf.xlu0
        %v402 = vpop.trf.xlu0
        %v403 = vpop.trf.xlu0
        %v404 = vpop.trf.xlu0
        %v405 = vpop.trf.xlu0
        %v406 = vpop.trf.xlu0
        %v407 = vpop.trf.xlu0
        %v408 = vpop.trf.xlu0
        %v409 = vpop.trf.xlu0
        %v410 = vpop.trf.xlu0
        %v411 = vpop.trf.xlu0
        %v412 = vpop.trf.xlu0
        %v413 = vpop.trf.xlu0
        %v414 = vpop.trf.xlu0
        %v415 = vpop.trf.xlu0
        %v416 = vpop.trf.xlu0
        %v417 = vld [vmem:[%s1] sm:$0x7f]
        %v418 = vld [vmem:[%s2] sm:$0x1]
        %v419 = vld [vmem:[%s3] sm:$0x1]
        %vm422 = vcmask 1042432
        %v423 = vrot.slane %v329, 5
        %v424 = vrot.slane %v330, 5
        %v425 = vsel %vm422, %v423, %v424
        %v429 = vsel %vm422, 0.0, %v423
        %v430 = vsel %vm422, %v424, 0.0
        %v431 = vlaneseq
        %v432 = vshrl.u32 %v431, 7
        %v433 = vsub.s32 0, %v432
        %v434 = vrot.slane %v417, %v433
        %v435 = vmul.f32 %v429, %v434
        %v436 = vmul.f32 %v425, %v434
        %v437 = vadd.f32 %v435, 0.0
        %v438 = vadd.f32 %v436, 0.0
        %v439 = vlaneseq
        %v440 = vshrl.u32 %v439, 7
        %v441 = vsub.s32 1, %v440
        %v442 = vrot.slane %v417, %v441
        %v443 = vmul.f32 %v429, %v442
        %v444 = vmul.f32 %v425, %v442
        %v445 = vmul.f32 %v430, %v442
        %vm449 = vcmask 1046528
        %v450 = vrot.slane %v443, 1
        %v451 = vrot.slane %v444, 1
        %v452 = vsel %vm449, %v450, %v451
        %v453 = vrot.slane %v445, 1
        %v454 = vsel %vm449, %v451, %v453
        %v457 = vadd.f32 %v437, %v452
        %v458 = vadd.f32 %v438, %v454
        %v459 = vlaneseq
        %v460 = vshrl.u32 %v459, 7
        %v461 = vsub.s32 2, %v460
        %v462 = vrot.slane %v417, %v461
        %v463 = vmul.f32 %v429, %v462
        %v464 = vmul.f32 %v425, %v462
        %v465 = vmul.f32 %v430, %v462
        %vm469 = vcmask 1045504
        %v470 = vrot.slane %v463, 2
        %v471 = vrot.slane %v464, 2
        %v472 = vsel %vm469, %v470, %v471
        %v473 = vrot.slane %v465, 2
        %v474 = vsel %vm469, %v471, %v473
        %v477 = vadd.f32 %v457, %v472
        %v478 = vadd.f32 %v458, %v474
        %v479 = vlaneseq
        %v480 = vshrl.u32 %v479, 7
        %v481 = vsub.s32 3, %v480
        %v482 = vrot.slane %v417, %v481
        %v483 = vmul.f32 %v429, %v482
        %v484 = vmul.f32 %v425, %v482
        %v485 = vmul.f32 %v430, %v482
        %vm489 = vcmask 1044480
        %v490 = vrot.slane %v483, 3
        %v491 = vrot.slane %v484, 3
        %v492 = vsel %vm489, %v490, %v491
        %v493 = vrot.slane %v485, 3
        %v494 = vsel %vm489, %v491, %v493
        %v497 = vadd.f32 %v477, %v492
        %v498 = vadd.f32 %v478, %v494
        %v499 = vlaneseq
        %v500 = vshrl.u32 %v499, 7
        %v501 = vsub.s32 4, %v500
        %v502 = vrot.slane %v417, %v501
        %v503 = vmul.f32 %v429, %v502
        %v504 = vmul.f32 %v425, %v502
        %v505 = vmul.f32 %v430, %v502
        %vm509 = vcmask 1043456
        %v510 = vrot.slane %v503, 4
        %v511 = vrot.slane %v504, 4
        %v512 = vsel %vm509, %v510, %v511
        %v513 = vrot.slane %v505, 4
        %v514 = vsel %vm509, %v511, %v513
        %v517 = vadd.f32 %v497, %v512
        %v518 = vadd.f32 %v498, %v514
        %v519 = vlaneseq
        %v520 = vshrl.u32 %v519, 7
        %v521 = vsub.s32 5, %v520
        %v522 = vrot.slane %v417, %v521
        %v523 = vmul.f32 %v429, %v522
        %v524 = vmul.f32 %v425, %v522
        %v525 = vmul.f32 %v430, %v522
        %v529 = vrot.slane %v523, 5
        %v530 = vrot.slane %v524, 5
        %v531 = vsel %vm422, %v529, %v530
        %v532 = vrot.slane %v525, 5
        %v533 = vsel %vm422, %v530, %v532
        %v536 = vadd.f32 %v517, %v531
        %v537 = vadd.f32 %v518, %v533
        %v538 = vlaneseq
        %v539 = vshrl.u32 %v538, 7
        %v540 = vsub.s32 6, %v539
        %v541 = vrot.slane %v417, %v540
        %v542 = vmul.f32 %v429, %v541
        %v543 = vmul.f32 %v425, %v541
        %v544 = vmul.f32 %v430, %v541
        %vm548 = vcmask 1041408
        %v549 = vrot.slane %v542, 6
        %v550 = vrot.slane %v543, 6
        %v551 = vsel %vm548, %v549, %v550
        %v552 = vrot.slane %v544, 6
        %v553 = vsel %vm548, %v550, %v552
        %v556 = vadd.f32 %v536, %v551
        %v557 = vadd.f32 %v537, %v553
        %v559 = vlaneseq
        %v560 = vshrl.u32 %v559, 7
        %v561 = vsub.s32 0, %v560
        %v562 = vrot.slane %v418, %v561
        %v564 = vmul.f32 %v556, %v562
        %v565 = vmul.f32 %v557, %v562
        %v567 = vlaneseq
        %v568 = vshrl.u32 %v567, 7
        %v569 = vsub.s32 0, %v568
        %v570 = vrot.slane %v419, %v569
        %v572 = vadd.f32 %v564, %v570
        %v573 = vadd.f32 %v565, %v570
        %v574 = vadd.f32 %v572, 3.0
        %v575 = vadd.f32 %v573, 3.0
        %v576 = vmax.f32 %v574, 0.0
        %v577 = vmax.f32 %v575, 0.0
        %v578 = vmin.f32 %v576, 6.0
        %v579 = vmin.f32 %v577, 6.0
        %v580 = vmul.f32 %v572, %v578
        %v581 = vmul.f32 %v573, %v579
        %v582 = vmul.f32 %v580, 0.16666667
        %v583 = vmul.f32 %v581, 0.16666667
        %v586 = vrot.slane %v401, 5
        %v587 = vrot.slane %v402, 5
        %v588 = vsel %vm422, %v586, %v587
        %v592 = vsel %vm422, 0.0, %v586
        %v593 = vsel %vm422, %v587, 0.0
        %v594 = vmul.f32 %v592, %v434
        %v595 = vmul.f32 %v588, %v434
        %v596 = vadd.f32 %v594, 0.0
        %v597 = vadd.f32 %v595, 0.0
        %v598 = vmul.f32 %v592, %v442
        %v599 = vmul.f32 %v588, %v442
        %v600 = vmul.f32 %v593, %v442
        %v604 = vrot.slane %v598, 1
        %v605 = vrot.slane %v599, 1
        %v606 = vsel %vm449, %v604, %v605
        %v607 = vrot.slane %v600, 1
        %v608 = vsel %vm449, %v605, %v607
        %v611 = vadd.f32 %v596, %v606
        %v612 = vadd.f32 %v597, %v608
        %v613 = vmul.f32 %v592, %v462
        %v614 = vmul.f32 %v588, %v462
        %v615 = vmul.f32 %v593, %v462
        %v619 = vrot.slane %v613, 2
        %v620 = vrot.slane %v614, 2
        %v621 = vsel %vm469, %v619, %v620
        %v622 = vrot.slane %v615, 2
        %v623 = vsel %vm469, %v620, %v622
        %v626 = vadd.f32 %v611, %v621
        %v627 = vadd.f32 %v612, %v623
        %v628 = vmul.f32 %v592, %v482
        %v629 = vmul.f32 %v588, %v482
        %v630 = vmul.f32 %v593, %v482
        %v634 = vrot.slane %v628, 3
        %v635 = vrot.slane %v629, 3
        %v636 = vsel %vm489, %v634, %v635
        %v637 = vrot.slane %v630, 3
        %v638 = vsel %vm489, %v635, %v637
        %v641 = vadd.f32 %v626, %v636
        %v642 = vadd.f32 %v627, %v638
        %v643 = vmul.f32 %v592, %v502
        %v644 = vmul.f32 %v588, %v502
        %v645 = vmul.f32 %v593, %v502
        %v649 = vrot.slane %v643, 4
        %v650 = vrot.slane %v644, 4
        %v651 = vsel %vm509, %v649, %v650
        %v652 = vrot.slane %v645, 4
        %v653 = vsel %vm509, %v650, %v652
        %v656 = vadd.f32 %v641, %v651
        %v657 = vadd.f32 %v642, %v653
        %v658 = vmul.f32 %v592, %v522
        %v659 = vmul.f32 %v588, %v522
        %v660 = vmul.f32 %v593, %v522
        %v664 = vrot.slane %v658, 5
        %v665 = vrot.slane %v659, 5
        %v666 = vsel %vm422, %v664, %v665
        %v667 = vrot.slane %v660, 5
        %v668 = vsel %vm422, %v665, %v667
        %v671 = vadd.f32 %v656, %v666
        %v672 = vadd.f32 %v657, %v668
        %v673 = vmul.f32 %v592, %v541
        %v674 = vmul.f32 %v588, %v541
        %v675 = vmul.f32 %v593, %v541
        %v679 = vrot.slane %v673, 6
        %v680 = vrot.slane %v674, 6
        %v681 = vsel %vm548, %v679, %v680
        %v682 = vrot.slane %v675, 6
        %v683 = vsel %vm548, %v680, %v682
        %v686 = vadd.f32 %v671, %v681
        %v687 = vadd.f32 %v672, %v683
        %v688 = vmul.f32 %v686, %v562
        %v689 = vmul.f32 %v687, %v562
        %v690 = vadd.f32 %v688, %v570
        %v691 = vadd.f32 %v689, %v570
        %v692 = vadd.f32 %v690, 3.0
        %v693 = vadd.f32 %v691, 3.0
        %v694 = vmax.f32 %v692, 0.0
        %v695 = vmax.f32 %v693, 0.0
        %v696 = vmin.f32 %v694, 6.0
        %v697 = vmin.f32 %v695, 6.0
        %v698 = vmul.f32 %v690, %v696
        %v699 = vmul.f32 %v691, %v697
        %v700 = vmul.f32 %v698, 0.16666667
        %v701 = vmul.f32 %v699, 0.16666667
        %v704 = vrot.slane %v582, 5
        %v705 = vrot.slane %v583, 5
        %v706 = vsel %vm422, %v704, %v705
        %v710 = vsel %vm422, 0.0, %v704
        %v711 = vsel %vm422, %v705, 0.0
        %v712 = vmul.f32 %v710, %v434
        %v713 = vmul.f32 %v706, %v434
        %v714 = vadd.f32 %v712, 0.0
        %v715 = vadd.f32 %v713, 0.0
        %v716 = vmul.f32 %v710, %v442
        %v717 = vmul.f32 %v706, %v442
        %v718 = vmul.f32 %v711, %v442
        %v722 = vrot.slane %v716, 1
        %v723 = vrot.slane %v717, 1
        %v724 = vsel %vm449, %v722, %v723
        %v725 = vrot.slane %v718, 1
        %v726 = vsel %vm449, %v723, %v725
        %v729 = vadd.f32 %v714, %v724
        %v730 = vadd.f32 %v715, %v726
        %v731 = vmul.f32 %v710, %v462
        %v732 = vmul.f32 %v706, %v462
        %v733 = vmul.f32 %v711, %v462
        %v737 = vrot.slane %v731, 2
        %v738 = vrot.slane %v732, 2
        %v739 = vsel %vm469, %v737, %v738
        %v740 = vrot.slane %v733, 2
        %v741 = vsel %vm469, %v738, %v740
        %v744 = vadd.f32 %v729, %v739
        %v745 = vadd.f32 %v730, %v741
        %v746 = vmul.f32 %v710, %v482
        %v747 = vmul.f32 %v706, %v482
        %v748 = vmul.f32 %v711, %v482
        %v752 = vrot.slane %v746, 3
        %v753 = vrot.slane %v747, 3
        %v754 = vsel %vm489, %v752, %v753
        %v755 = vrot.slane %v748, 3
        %v756 = vsel %vm489, %v753, %v755
        %v759 = vadd.f32 %v744, %v754
        %v760 = vadd.f32 %v745, %v756
        %v761 = vmul.f32 %v710, %v502
        %v762 = vmul.f32 %v706, %v502
        %v763 = vmul.f32 %v711, %v502
        %v767 = vrot.slane %v761, 4
        %v768 = vrot.slane %v762, 4
        %v769 = vsel %vm509, %v767, %v768
        %v770 = vrot.slane %v763, 4
        %v771 = vsel %vm509, %v768, %v770
        %v774 = vadd.f32 %v759, %v769
        %v775 = vadd.f32 %v760, %v771
        %v776 = vmul.f32 %v710, %v522
        %v777 = vmul.f32 %v706, %v522
        %v778 = vmul.f32 %v711, %v522
        %v782 = vrot.slane %v776, 5
        %v783 = vrot.slane %v777, 5
        %v784 = vsel %vm422, %v782, %v783
        %v785 = vrot.slane %v778, 5
        %v786 = vsel %vm422, %v783, %v785
        %v789 = vadd.f32 %v774, %v784
        %v790 = vadd.f32 %v775, %v786
        %v791 = vmul.f32 %v710, %v541
        %v792 = vmul.f32 %v706, %v541
        %v793 = vmul.f32 %v711, %v541
        %v797 = vrot.slane %v791, 6
        %v798 = vrot.slane %v792, 6
        %v799 = vsel %vm548, %v797, %v798
        %v800 = vrot.slane %v793, 6
        %v801 = vsel %vm548, %v798, %v800
        %v804 = vadd.f32 %v789, %v799
        %v805 = vadd.f32 %v790, %v801
        %v806 = vxor.u32 %v804, 2147483648
        %v807 = vxor.u32 %v805, 2147483648
        %v808 = vmul.f32 %v806, 1.442695
        %v809 = vpow.pop %v808
        %v810 = vmul.f32 %v807, 1.442695
        %v811 = vpow.pop %v810
        %v812 = vadd.f32 %v809, 1.0
        %v813 = vadd.f32 %v811, 1.0
        %v814 = vrcp.pop %v812
        %v815 = vmul.f32 1.0, %v814
        %v816 = vrcp.pop %v813
        %v817 = vmul.f32 1.0, %v816
        %v820 = vrot.slane %v700, 5
        %v821 = vrot.slane %v701, 5
        %v822 = vsel %vm422, %v820, %v821
        %v826 = vsel %vm422, 0.0, %v820
        %v827 = vsel %vm422, %v821, 0.0
        %v828 = vmul.f32 %v826, %v434
        %v829 = vmul.f32 %v822, %v434
        %v830 = vadd.f32 %v828, 0.0
        %v831 = vadd.f32 %v829, 0.0
        %v832 = vmul.f32 %v826, %v442
        %v833 = vmul.f32 %v822, %v442
        %v834 = vmul.f32 %v827, %v442
        %v838 = vrot.slane %v832, 1
        %v839 = vrot.slane %v833, 1
        %v840 = vsel %vm449, %v838, %v839
        %v841 = vrot.slane %v834, 1
        %v842 = vsel %vm449, %v839, %v841
        %v845 = vadd.f32 %v830, %v840
        %v846 = vadd.f32 %v831, %v842
        %v847 = vmul.f32 %v826, %v462
        %v848 = vmul.f32 %v822, %v462
        %v849 = vmul.f32 %v827, %v462
        %v853 = vrot.slane %v847, 2
        %v854 = vrot.slane %v848, 2
        %v855 = vsel %vm469, %v853, %v854
        %v856 = vrot.slane %v849, 2
        %v857 = vsel %vm469, %v854, %v856
        %v860 = vadd.f32 %v845, %v855
        %v861 = vadd.f32 %v846, %v857
        %v862 = vmul.f32 %v826, %v482
        %v863 = vmul.f32 %v822, %v482
        %v864 = vmul.f32 %v827, %v482
        %v868 = vrot.slane %v862, 3
        %v869 = vrot.slane %v863, 3
        %v870 = vsel %vm489, %v868, %v869
        %v871 = vrot.slane %v864, 3
        %v872 = vsel %vm489, %v869, %v871
        %v875 = vadd.f32 %v860, %v870
        %v876 = vadd.f32 %v861, %v872
        %v877 = vmul.f32 %v826, %v502
        %v878 = vmul.f32 %v822, %v502
        %v879 = vmul.f32 %v827, %v502
        %v883 = vrot.slane %v877, 4
        %v884 = vrot.slane %v878, 4
        %v885 = vsel %vm509, %v883, %v884
        %v886 = vrot.slane %v879, 4
        %v887 = vsel %vm509, %v884, %v886
        %v890 = vadd.f32 %v875, %v885
        %v891 = vadd.f32 %v876, %v887
        %v892 = vmul.f32 %v826, %v522
        %v893 = vmul.f32 %v822, %v522
        %v894 = vmul.f32 %v827, %v522
        %v898 = vrot.slane %v892, 5
        %v899 = vrot.slane %v893, 5
        %v900 = vsel %vm422, %v898, %v899
        %v901 = vrot.slane %v894, 5
        %v902 = vsel %vm422, %v899, %v901
        %v905 = vadd.f32 %v890, %v900
        %v906 = vadd.f32 %v891, %v902
        %v907 = vmul.f32 %v826, %v541
        %v908 = vmul.f32 %v822, %v541
        %v909 = vmul.f32 %v827, %v541
        %v913 = vrot.slane %v907, 6
        %v914 = vrot.slane %v908, 6
        %v915 = vsel %vm548, %v913, %v914
        %v916 = vrot.slane %v909, 6
        %v917 = vsel %vm548, %v914, %v916
        %v920 = vadd.f32 %v905, %v915
        %v921 = vadd.f32 %v906, %v917
        %v922 = vxor.u32 %v920, 2147483648
        %v923 = vxor.u32 %v921, 2147483648
        %v924 = vmul.f32 %v922, 1.442695
        %v925 = vpow.pop %v924
        %v926 = vmul.f32 %v923, 1.442695
        %v927 = vpow.pop %v926
        %v928 = vadd.f32 %v925, 1.0
        %v929 = vadd.f32 %v927, 1.0
        %v930 = vrcp.pop %v928
        %v931 = vmul.f32 1.0, %v930
        %v932 = vrcp.pop %v929
        %v933 = vmul.f32 1.0, %v932
        %934 = vxpose.xlu0.b32.start [1/16] %v815, 128
        %935 = vxpose.xlu0.b32.cont [2/16] %v817, 128
        %936 = vxpose.xlu0.b32.cont [3/16] 0.0, 128
        %937 = vxpose.xlu0.b32.cont [4/16] 0.0, 128
        %938 = vxpose.xlu0.b32.cont [5/16] 0.0, 128
        %939 = vxpose.xlu0.b32.cont [6/16] 0.0, 128
        %940 = vxpose.xlu0.b32.cont [7/16] 0.0, 128
        %941 = vxpose.xlu0.b32.cont [8/16] 0.0, 128
        %942 = vxpose.xlu0.b32.cont [9/16] 0.0, 128
        %943 = vxpose.xlu0.b32.cont [10/16] 0.0, 128
        %944 = vxpose.xlu0.b32.cont [11/16] 0.0, 128
        %945 = vxpose.xlu0.b32.cont [12/16] 0.0, 128
        %946 = vxpose.xlu0.b32.cont [13/16] 0.0, 128
        %947 = vxpose.xlu0.b32.cont [14/16] 0.0, 128
        %948 = vxpose.xlu0.b32.cont [15/16] 0.0, 128
        %949 = vxpose.xlu0.b32.end [16/16] 0.0, 128
        %v950 = vpop.trf.xlu0
        %v951 = vpop.trf.xlu0
        %v952 = vpop.trf.xlu0
        %v953 = vpop.trf.xlu0
        %v954 = vpop.trf.xlu0
        %v955 = vpop.trf.xlu0
        %v956 = vpop.trf.xlu0
        %v957 = vpop.trf.xlu0
        %v958 = vpop.trf.xlu0
        %v959 = vpop.trf.xlu0
        %v960 = vpop.trf.xlu0
        %v961 = vpop.trf.xlu0
        %v962 = vpop.trf.xlu0
        %v963 = vpop.trf.xlu0
        %v964 = vpop.trf.xlu0
        %v965 = vpop.trf.xlu0
        %966 = vxpose.xlu0.b32.start [1/16] %v931, 128
        %967 = vxpose.xlu0.b32.cont [2/16] %v933, 128
        %968 = vxpose.xlu0.b32.cont [3/16] 0.0, 128
        %969 = vxpose.xlu0.b32.cont [4/16] 0.0, 128
        %970 = vxpose.xlu0.b32.cont [5/16] 0.0, 128
        %971 = vxpose.xlu0.b32.cont [6/16] 0.0, 128
        %972 = vxpose.xlu0.b32.cont [7/16] 0.0, 128
        %973 = vxpose.xlu0.b32.cont [8/16] 0.0, 128
        %974 = vxpose.xlu0.b32.cont [9/16] 0.0, 128
        %975 = vxpose.xlu0.b32.cont [10/16] 0.0, 128
        %976 = vxpose.xlu0.b32.cont [11/16] 0.0, 128
        %977 = vxpose.xlu0.b32.cont [12/16] 0.0, 128
        %978 = vxpose.xlu0.b32.cont [13/16] 0.0, 128
        %979 = vxpose.xlu0.b32.cont [14/16] 0.0, 128
        %980 = vxpose.xlu0.b32.cont [15/16] 0.0, 128
        %981 = vxpose.xlu0.b32.end [16/16] 0.0, 128
        %v982 = vpop.trf.xlu0
        %v983 = vpop.trf.xlu0
        %v984 = vpop.trf.xlu0
        %v985 = vpop.trf.xlu0
        %v986 = vpop.trf.xlu0
        %v987 = vpop.trf.xlu0
        %v988 = vpop.trf.xlu0
        %v989 = vpop.trf.xlu0
        %v990 = vpop.trf.xlu0
        %v991 = vpop.trf.xlu0
        %v992 = vpop.trf.xlu0
        %v993 = vpop.trf.xlu0
        %v994 = vpop.trf.xlu0
        %v995 = vpop.trf.xlu0
        %v996 = vpop.trf.xlu0
        %v997 = vpop.trf.xlu0
        %v1000 = vunpack.c.l.s4 1966171168
        %v1001 = vunpack.c.0.s8 %v1000
        %v1002 = vlaneseq
        %v1003 = vshrl.u32 %v1002, 7
        %v1004 = vsub.s32 %v1001, %v1003
        %v1005 = vrot.slane %v982, %v1004
        %v1006 = vcombine.high %v1005, %v1005
        %v1008 = vunpack.c.l.s4 1966171168
        %v1009 = vunpack.c.0.s8 %v1008
        %v1010 = vlaneseq
        %v1011 = vshrl.u32 %v1010, 7
        %v1012 = vsub.s32 %v1009, %v1011
        %v1013 = vrot.slane %v1005, %v1012
        %v1015 = vunpack.c.l.s4 1966171168
        %v1016 = vunpack.c.0.s8 %v1015
        %v1017 = vlaneseq
        %v1018 = vshrl.u32 %v1017, 7
        %v1019 = vsub.s32 %v1016, %v1018
        %v1020 = vrot.slane %v1006, %v1019
        %v1021 = vcombine.high %v1013, %v1013
        %v1022 = vcombine.high %v1020, %v1020
        %v1023 = vlaneseq
        %v1024 = vshrl.u32 %v1023, 7
        %v1025 = vsub.s32 0, %v1024
        %v1026 = vrot.slane %v1013, %v1025
        %v1027 = vlaneseq
        %v1028 = vshrl.u32 %v1027, 7
        %v1029 = vsub.s32 0, %v1028
        %v1030 = vrot.slane %v1020, %v1029
        %v1031 = vlaneseq
        %v1032 = vshrl.u32 %v1031, 7
        %v1033 = vsub.s32 0, %v1032
        %v1034 = vrot.slane %v1021, %v1033
        %v1035 = vlaneseq
        %v1036 = vshrl.u32 %v1035, 7
        %v1037 = vsub.s32 0, %v1036
        %v1038 = vrot.slane %v1022, %v1037
        %v1043 = vmul.f32 %v216, %v1026
        %v1044 = vmul.f32 %v217, %v1026
        %v1045 = vmul.f32 %v218, %v1030
        %v1046 = vmul.f32 %v219, %v1030
        %v1047 = vmul.f32 %v220, %v1034
        %v1048 = vmul.f32 %v221, %v1034
        %v1049 = vmul.f32 %v222, %v1038
        %v1050 = vmul.f32 %v223, %v1038
        %v1051 = vlaneseq
        %v1052 = vshrl.u32 %v1051, 7
        %v1053 = vsub.s32 0, %v1052
        %v1054 = vrot.slane %v950, %v1053
        %1056 = vbcast.lane.b32.xlu0 %v1054, 256
        %v1057 = vpop.permute.xlu0 %1056
        %s1059 = sor.u32 256, 8
        %1060 = vbcast.lane.b32.xlu0 %v1054, %s1059
        %v1061 = vpop.permute.xlu0 %1060
        %v1062 = vlaneseq
        %v1063 = vshrl.u32 %v1062, 7
        %v1064 = vsub.s32 1, %v1063
        %v1065 = vrot.slane %v950, %v1064
        %1067 = vbcast.lane.b32.xlu0 %v1065, 256
        %v1068 = vpop.permute.xlu0 %1067
        %s1070 = sor.u32 256, 8
        %1071 = vbcast.lane.b32.xlu0 %v1065, %s1070
        %v1072 = vpop.permute.xlu0 %1071
        %v1073 = vlaneseq
        %v1074 = vshrl.u32 %v1073, 7
        %v1075 = vsub.s32 2, %v1074
        %v1076 = vrot.slane %v950, %v1075
        %1078 = vbcast.lane.b32.xlu0 %v1076, 256
        %v1079 = vpop.permute.xlu0 %1078
        %s1081 = sor.u32 256, 8
        %1082 = vbcast.lane.b32.xlu0 %v1076, %s1081
        %v1083 = vpop.permute.xlu0 %1082
        %v1084 = vlaneseq
        %v1085 = vshrl.u32 %v1084, 7
        %v1086 = vsub.s32 3, %v1085
        %v1087 = vrot.slane %v950, %v1086
        %1089 = vbcast.lane.b32.xlu0 %v1087, 256
        %v1090 = vpop.permute.xlu0 %1089
        %s1092 = sor.u32 256, 8
        %1093 = vbcast.lane.b32.xlu0 %v1087, %s1092
        %v1094 = vpop.permute.xlu0 %1093
        %v1095 = vmul.f32 %v1043, %v1057
        %v1096 = vmul.f32 %v1044, %v1061
        %v1097 = vmul.f32 %v1045, %v1068
        %v1098 = vmul.f32 %v1046, %v1072
        %v1099 = vmul.f32 %v1047, %v1079
        %v1100 = vmul.f32 %v1048, %v1083
        %v1101 = vmul.f32 %v1049, %v1090
        %v1102 = vmul.f32 %v1050, %v1094
        %1103 = vst.msk [vmem:[%s215] sm:$0xff] %vm224, %v1095
        %1104 = vst.msk [vmem:[%s215 + $0x8] sm:$0xff] %vm224, %v1096
        %1105 = vst.msk [vmem:[%s215 + $0x10] sm:$0xff] %vm224, %v1097
        %1106 = vst.msk [vmem:[%s215 + $0x18] sm:$0xff] %vm224, %v1098
        %1107 = vst.msk [vmem:[%s215 + $0x20] sm:$0xff] %vm224, %v1099
        %1108 = vst.msk [vmem:[%s215 + $0x28] sm:$0xff] %vm224, %v1100
        %1109 = vst.msk [vmem:[%s215 + $0x30] sm:$0xff] %vm224, %v1101
        %1110 = vst.msk [vmem:[%s215 + $0x38] sm:$0xff] %vm224, %v1102
        %s1111 = sand.u32 %s118, 1
        %s1112 = scalar_lea.sflag [#allocation4], %s1111
        %s1113 = sand.u32 %s118, 1
        %s1114 = smul.addr %s1113, 64
        %s1115 = scalar_lea.vmem [#allocation5], %s1114
        // Predicated region
        $region41: #{tpu_custom_call.1} parent=35 // pred_check
          %p1116 = pneg %p128
        $region42: #{tpu_custom_call.1} parent=35 // pred_check_branch
          %1118 = sbr.rel (%p1116) target = $region44
        $region43: #{tpu_custom_call.1} parent=35 // pred_region
          %s1120 = ssub.s32 1024, 1024
          %1121 = vsyncadd %s1112, %s1120
          %s1122 = smul.addr %s21, 8
          %s1123 = smul.addr %s1122, 128
          %s1124 = scalar_lea.hbm %s4, %s1123
          %s1125 = sshll.u32 %s1115, 4
          %s1126 = int_to_ptr.vmem [resolvable:$true] %s1125
          %1131 = dma.vmem_to_hbm [thread:$0]  %s1126, 1024, %s1124, %s1112, 128, 128, 8
        $region44: #{tpu_custom_call.1} parent=35 // pred_fallthru
          _
      $region36: #{tpu_custom_call.1} parent=5 // pred_fallthru
        _
      %p1132 = scmp.le.s32.totalorder 2, %s16
      // Predicated region
      $region45: #{tpu_custom_call.1} parent=5 // pred_check
        %p1133 = pneg %p1132
      $region46: #{tpu_custom_call.1} parent=5 // pred_check_branch
        %1135 = sbr.rel (%p1133) target = $region48
      $region47: #{tpu_custom_call.1} parent=5 // pred_region
        %s1136 = ssub.s32 %s16, 2
        // Predicated region
        $region49: #{tpu_custom_call.1} parent=47 // pred_check
          %p1137 = pneg %p134
        $region50: #{tpu_custom_call.1} parent=47 // pred_check_branch
          %1139 = sbr.rel (%p1137) target = $region52
        $region51: #{tpu_custom_call.1} parent=47 // pred_region
          %s1140 = sand.u32 %s119, 1
          %s1141 = scalar_lea.sflag [#allocation4], %s1140
          %s1142 = sand.u32 %s119, 1
          %s1143 = smul.addr %s1142, 64
          %s1144 = scalar_lea.vmem [#allocation5], %s1143
          %1145 = dma.done %s1141, 1024
        $region52: #{tpu_custom_call.1} parent=47 // pred_fallthru
          _
      $region48: #{tpu_custom_call.1} parent=5 // pred_fallthru
        _
    $region6: #{tpu_custom_call.1} parent=1 // loop_footer
      %s20 = sadd.s32 1, %s16
    $region7: #{tpu_custom_call.1} parent=1 // loop_footer_branch
      %15 = sbr.rel target = $region3
    $region8: #{tpu_custom_call.1} parent=1 // loop_exit
      _
    %1146 = vsyncpa [#allocation3], 1
    %s1147 = scalar_lea.sflag [#allocation3], 1
    %1148 = vsyncpa %s1147, 1
    %1149 = vsyncpa [#allocation4], 1
    %s1150 = scalar_lea.sflag [#allocation4], 1
    %1151 = vsyncpa %s1150, 1

</llo_original>
